<compile_context>
chip_gen: v5e
topology: v5e:2x2
jax: 0.10.0
libtpu: 0.0.40
codegen_flags: <defaults>
</compile_context>

<pallas_src>
import functools

import numpy as np
import jax
import jax.numpy as jnp
from jax.experimental import pallas as pl
from jax.experimental.pallas import tpu as pltpu


# ------------------------------ helpers ----------------------------------- #
def _apply_act(y, name):
    if name == "relu":
        return jnp.maximum(y, 0.0)
    if name == "tanh":
        return jnp.tanh(y)
    if name is None or name == "linear":
        return y
    raise ValueError(f"unsupported activation: {name}")


def _conv_tap_selectors(B, L_in, L_out, K, stride):
    """S[k, b*L_out+lo, b*L_in + lo*stride + k] = 1  (im2col row gather, per tap)."""
    S = np.zeros((K, B * L_out, B * L_in), dtype=np.float32)
    r = np.arange(B * L_out)
    b, lo = r // L_out, r % L_out
    for k in range(K):
        S[k, r, b * L_in + lo * stride + k] = 1.0
    return jnp.asarray(S)


def _flatten_selectors(B, L_last):
    """G[lo, b, b*L_last + lo] = 1  (pick length-position `lo` of each batch row)."""
    G = np.zeros((L_last, B, B * L_last), dtype=np.float32)
    b = np.arange(B)
    for lo in range(L_last):
        G[lo, b, b * L_last + lo] = 1.0
    return jnp.asarray(G)


# ------------------------------ fused kernel ------------------------------ #
def _encoder_fused_kernel(*refs, n_conv, n_fc, kernel_size, act_conv, act_fc):
    # refs layout:
    #   x_ref,
    #   [S_ref, w_ref, b_ref] * n_conv,          conv layers
    #   G_ref, w0_ref, b0_ref,                   first fc layer (flatten folded in)
    #   [w_ref, b_ref] * (n_fc - 1),             remaining fc layers
    #   out_ref
    x_ref = refs[0]
    pos = 1
    conv_layers = []
    for _ in range(n_conv):
        conv_layers.append((refs[pos], refs[pos + 1], refs[pos + 2]))
        pos += 3
    g_ref, w0_ref, b0_ref = refs[pos], refs[pos + 1], refs[pos + 2]
    pos += 3
    fc_rest = []
    for _ in range(n_fc - 1):
        fc_rest.append((refs[pos], refs[pos + 1]))
        pos += 2
    out_ref = refs[pos]

    f32 = jnp.float32

    # ---- conv stack; activations kept channels-last as (B*L, C) in VMEM ----
    h = x_ref[...].astype(f32)                       # (B*L0, C0)
    for s_ref, w_ref, b_ref in conv_layers:
        acc = None
        for k in range(kernel_size):                 # unrolled over the 5 taps
            rows_k = jnp.dot(s_ref[k], h, preferred_element_type=f32)   # im2col gather (MXU)
            part = jnp.dot(rows_k, w_ref[k], preferred_element_type=f32)
            acc = part if acc is None else acc + part
        h = _apply_act(acc + b_ref[...], act_conv)   # (B*L_out, C_out)

    # ---- fc stack; the torch flatten is folded into per-position dots ----
    n_pos = g_ref.shape[0]                           # L_last (final conv length)
    z = None
    for lo in range(n_pos):
        h_lo = jnp.dot(g_ref[lo], h, preferred_element_type=f32)        # (B, C_last)
        part = jnp.dot(h_lo, w0_ref[lo], preferred_element_type=f32)
        z = part if z is None else z + part
    z = z + b0_ref[...]
    if n_fc > 1:
        z = _apply_act(z, act_fc)
    for i, (w_ref, b_ref) in enumerate(fc_rest):
        z = jnp.dot(z, w_ref[...], preferred_element_type=f32) + b_ref[...]
        if i < n_fc - 2:                             # no activation after the last linear
            z = _apply_act(z, act_fc)

    out_ref[...] = z.astype(out_ref.dtype)


# --------------------------- params & packing ------------------------------ #
def init_params(key, conv_arch, fc_arch, kernel_size):
    """Synthetic PyTorch-layout weights (uniform; not torch's exact default init)."""
    params = {"conv": [], "fc": []}
    for i in range(len(conv_arch) - 1):
        key, k1, k2 = jax.random.split(key, 3)
        ci, co = conv_arch[i], conv_arch[i + 1]
        bound = 1.0 / float(np.sqrt(ci * kernel_size))
        w = jax.random.uniform(k1, (co, ci, kernel_size), jnp.float32, -bound, bound)
        b = jax.random.uniform(k2, (co,), jnp.float32, -bound, bound)
        params["conv"].append((w, b))
    for i in range(len(fc_arch) - 1):
        key, k1, k2 = jax.random.split(key, 3)
        fi, fo = fc_arch[i], fc_arch[i + 1]
        bound = 1.0 / float(np.sqrt(fi))
        w = jax.random.uniform(k1, (fo, fi), jnp.float32, -bound, bound)
        b = jax.random.uniform(k2, (fo,), jnp.float32, -bound, bound)
        params["fc"].append((w, b))
    return params


def pack_params(params, *, mesh_size, kernel_size, stride):
    """One-time repack of PyTorch-layout weights into the kernel's layouts."""
    assert params["conv"] and params["fc"]
    L = mesh_size
    for _ in params["conv"]:
        L = (L - kernel_size) // stride + 1
    L_last = L

    packed = {"conv": [], "fc": []}
    for w, b in params["conv"]:
        co, _, _ = w.shape
        # [k, ci, co] = torch_w[co, ci, k]
        packed["conv"].append((jnp.transpose(w, (2, 1, 0)), b.reshape(1, co)))
    for i, (w, b) in enumerate(params["fc"]):
        n, f = w.shape
        if i == 0:
            co_last = params["conv"][-1][0].shape[0]
            assert f == co_last * L_last, (f, co_last, L_last)
            # torch flatten index = co*L_last + lo ; kernel visits features per
            # length position lo, so store the first fc weight as (L_last, Co, N).
            w_p = jnp.transpose(w.reshape(n, co_last, L_last), (2, 1, 0))
        else:
            w_p = jnp.transpose(w)                    # (in, out)
        packed["fc"].append((w_p, b.reshape(1, n)))
    return packed, L_last


# ------------------------------- forward ----------------------------------- #
def encoder_cnnet1d_forward(packed, x, *, conv_arch, fc_arch, kernel_size=5, stride=3,
                            activation_conv="relu", activation_fc="tanh"):
    """x: (n_batch, mesh_size, in_channel) -> beta: (n_batch, n_latent)."""
    # TODO(synk): CNNet1d source not provided; reconstructed as conv stack ->
    # flatten -> fc stack (activation_fc omitted after the last linear).
    B, L, C0 = x.shape
    n_conv = len(conv_arch) - 1
    n_fc = len(fc_arch) - 1
    assert C0 == conv_arch[0] and n_conv >= 1 and n_fc >= 1

    # The permute(0,2,1) is folded into the kernel (channels-last conv), so the
    # only host-side op is this free contiguous reshape.
    inputs = [x.reshape(B * L, C0)]

    L_in = L
    for li in range(n_conv):
        L_out = (L_in - kernel_size) // stride + 1
        assert L_out >= 1, "mesh_size too small for the conv stack"
        w_p, b_p = packed["conv"][li]
        inputs += [_conv_tap_selectors(B, L_in, L_out, kernel_size, stride), w_p, b_p]
        L_in = L_out
    L_last = L_in

    w0, b0 = packed["fc"][0]
    inputs += [_flatten_selectors(B, L_last), w0, b0]
    for w_p, b_p in packed["fc"][1:]:
        inputs += [w_p, b_p]

    kern = functools.partial(
        _encoder_fused_kernel,
        n_conv=n_conv, n_fc=n_fc, kernel_size=kernel_size,
        act_conv=activation_conv, act_fc=activation_fc)

    return pl.pallas_call(
        kern,
        out_shape=jax.ShapeDtypeStruct((B, fc_arch[-1]), x.dtype),
        in_specs=[pl.BlockSpec(memory_space=pltpu.MemorySpace.VMEM) for _ in inputs],
        out_specs=pl.BlockSpec(memory_space=pltpu.MemorySpace.VMEM),
    )(*inputs)


# --------------------------- pure-JAX reference ---------------------------- #
def reference_forward(params, x, *, kernel_size=5, stride=3,
                      activation_conv="relu", activation_fc="tanh"):
    hp = jax.lax.Precision.HIGHEST
    h = jnp.transpose(x, (0, 2, 1))                       # == x.permute(0, 2, 1)
    for w, b in params["conv"]:
        _, _, k = w.shape
        L_ = h.shape[2]
        L_out = (L_ - k) // stride + 1
        cols = []
        for lo in range(L_out):
            patch = h[:, :, lo * stride: lo * stride + k]                  # (B, Ci, K)
            cols.append(jnp.einsum("bck,ock->bo", patch, w, precision=hp) + b)
        h = _apply_act(jnp.stack(cols, axis=-1), activation_conv)          # (B, Co, L_out)
    z = h.reshape(h.shape[0], -1)                                          # channel-major flatten
    n_fc = len(params["fc"])
    for i, (w, b) in enumerate(params["fc"]):
        z = jnp.dot(z, w.T, precision=hp) + b
        if i < n_fc - 1:
            z = _apply_act(z, activation_fc)
    return z


if __name__ == "__main__":
    key = jax.random.PRNGKey(0)
    n_batch, mesh_size = 2, 32
    conv_arch = [4, 8, 16]                 # in_channel = 4
    kernel_size, stride = 5, 3             # spatial: 32 -> 10 -> 2
    fc_arch = [32, 16, 8]                  # flatten = 16*2 = 32, n_latent = 8

    kp, kx = jax.random.split(key)
    params = init_params(kp, conv_arch, fc_arch, kernel_size)
    packed, _ = pack_params(params, mesh_size=mesh_size,
                            kernel_size=kernel_size, stride=stride)
    x = jax.random.normal(kx, (n_batch, mesh_size, conv_arch[0]), jnp.float32)

    fwd = jax.jit(functools.partial(
        encoder_cnnet1d_forward, conv_arch=conv_arch, fc_arch=fc_arch,
        kernel_size=kernel_size, stride=stride))
    beta = jax.block_until_ready(fwd(packed, x))

    assert beta.shape == (n_batch, fc_arch[-1]), beta.shape
    assert jnp.all(jnp.isfinite(beta))

    ref = reference_forward(params, x, kernel_size=kernel_size, stride=stride)
    err = float(jnp.max(jnp.abs(beta - ref)))
    assert jnp.allclose(beta, ref, rtol=1e-3, atol=1e-3), err

    print("KERNEL_OK")
</pallas_src>

<mosaic_0001>
module attributes {stable_mosaic.version = 11 : i64} {
  func.func @_encoder_fused_kernel(%arg0: memref<64x4xf32, #tpu.memory_space<vmem>>, %arg1: memref<5x20x64xf32, #tpu.memory_space<vmem>>, %arg2: memref<5x4x8xf32, #tpu.memory_space<vmem>>, %arg3: memref<1x8xf32, #tpu.memory_space<vmem>>, %arg4: memref<5x4x20xf32, #tpu.memory_space<vmem>>, %arg5: memref<5x8x16xf32, #tpu.memory_space<vmem>>, %arg6: memref<1x16xf32, #tpu.memory_space<vmem>>, %arg7: memref<2x2x4xf32, #tpu.memory_space<vmem>>, %arg8: memref<2x16x16xf32, #tpu.memory_space<vmem>>, %arg9: memref<1x16xf32, #tpu.memory_space<vmem>>, %arg10: memref<16x8xf32, #tpu.memory_space<vmem>>, %arg11: memref<1x8xf32, #tpu.memory_space<vmem>>, %arg12: memref<2x8xf32, #tpu.memory_space<vmem>>) attributes {dimension_semantics = [], scalar_prefetch = 0 : i64, scratch_operands = 0 : i64, tpu.core_type = #tpu.core_type<tc>} {
    %c0 = arith.constant 0 : index
    %c0_0 = arith.constant 0 : index
    %0 = vector.load %arg0[%c0, %c0_0] : memref<64x4xf32, #tpu.memory_space<vmem>>, vector<64x4xf32>
    %c0_1 = arith.constant 0 : index
    %c0_2 = arith.constant 0 : index
    %c0_3 = arith.constant 0 : index
    %1 = vector.load %arg1[%c0_1, %c0_2, %c0_3] : memref<5x20x64xf32, #tpu.memory_space<vmem>>, vector<1x20x64xf32>
    %2 = vector.shape_cast %1 : vector<1x20x64xf32> to vector<20x64xf32>
    %cst = arith.constant dense<0.000000e+00> : vector<20x4xf32>
    %3 = tpu.matmul %2, %0, %cst {dimension_numbers = #tpu.dot_dimension_numbers<[1], [0], [0], [1], [0, 0, 1, 1], [], []>} : vector<20x64xf32>, vector<64x4xf32>, vector<20x4xf32> -> vector<20x4xf32>
    %c0_4 = arith.constant 0 : index
    %c0_5 = arith.constant 0 : index
    %c0_6 = arith.constant 0 : index
    %4 = vector.load %arg2[%c0_4, %c0_5, %c0_6] : memref<5x4x8xf32, #tpu.memory_space<vmem>>, vector<1x4x8xf32>
    %5 = vector.shape_cast %4 : vector<1x4x8xf32> to vector<4x8xf32>
    %cst_7 = arith.constant dense<0.000000e+00> : vector<20x8xf32>
    %6 = tpu.matmul %3, %5, %cst_7 {dimension_numbers = #tpu.dot_dimension_numbers<[1], [0], [0], [1], [0, 0, 1, 1], [], []>} : vector<20x4xf32>, vector<4x8xf32>, vector<20x8xf32> -> vector<20x8xf32>
    %c1 = arith.constant 1 : index
    %c0_8 = arith.constant 0 : index
    %c0_9 = arith.constant 0 : index
    %7 = vector.load %arg1[%c1, %c0_8, %c0_9] : memref<5x20x64xf32, #tpu.memory_space<vmem>>, vector<1x20x64xf32>
    %8 = vector.shape_cast %7 : vector<1x20x64xf32> to vector<20x64xf32>
    %cst_10 = arith.constant dense<0.000000e+00> : vector<20x4xf32>
    %9 = tpu.matmul %8, %0, %cst_10 {dimension_numbers = #tpu.dot_dimension_numbers<[1], [0], [0], [1], [0, 0, 1, 1], [], []>} : vector<20x64xf32>, vector<64x4xf32>, vector<20x4xf32> -> vector<20x4xf32>
    %c1_11 = arith.constant 1 : index
    %c0_12 = arith.constant 0 : index
    %c0_13 = arith.constant 0 : index
    %10 = vector.load %arg2[%c1_11, %c0_12, %c0_13] : memref<5x4x8xf32, #tpu.memory_space<vmem>>, vector<1x4x8xf32>
    %11 = vector.shape_cast %10 : vector<1x4x8xf32> to vector<4x8xf32>
    %cst_14 = arith.constant dense<0.000000e+00> : vector<20x8xf32>
    %12 = tpu.matmul %9, %11, %cst_14 {dimension_numbers = #tpu.dot_dimension_numbers<[1], [0], [0], [1], [0, 0, 1, 1], [], []>} : vector<20x4xf32>, vector<4x8xf32>, vector<20x8xf32> -> vector<20x8xf32>
    %13 = arith.addf %6, %12 : vector<20x8xf32>
    %c2 = arith.constant 2 : index
    %c0_15 = arith.constant 0 : index
    %c0_16 = arith.constant 0 : index
    %14 = vector.load %arg1[%c2, %c0_15, %c0_16] : memref<5x20x64xf32, #tpu.memory_space<vmem>>, vector<1x20x64xf32>
    %15 = vector.shape_cast %14 : vector<1x20x64xf32> to vector<20x64xf32>
    %cst_17 = arith.constant dense<0.000000e+00> : vector<20x4xf32>
    %16 = tpu.matmul %15, %0, %cst_17 {dimension_numbers = #tpu.dot_dimension_numbers<[1], [0], [0], [1], [0, 0, 1, 1], [], []>} : vector<20x64xf32>, vector<64x4xf32>, vector<20x4xf32> -> vector<20x4xf32>
    %c2_18 = arith.constant 2 : index
    %c0_19 = arith.constant 0 : index
    %c0_20 = arith.constant 0 : index
    %17 = vector.load %arg2[%c2_18, %c0_19, %c0_20] : memref<5x4x8xf32, #tpu.memory_space<vmem>>, vector<1x4x8xf32>
    %18 = vector.shape_cast %17 : vector<1x4x8xf32> to vector<4x8xf32>
    %cst_21 = arith.constant dense<0.000000e+00> : vector<20x8xf32>
    %19 = tpu.matmul %16, %18, %cst_21 {dimension_numbers = #tpu.dot_dimension_numbers<[1], [0], [0], [1], [0, 0, 1, 1], [], []>} : vector<20x4xf32>, vector<4x8xf32>, vector<20x8xf32> -> vector<20x8xf32>
    %20 = arith.addf %13, %19 : vector<20x8xf32>
    %c3 = arith.constant 3 : index
    %c0_22 = arith.constant 0 : index
    %c0_23 = arith.constant 0 : index
    %21 = vector.load %arg1[%c3, %c0_22, %c0_23] : memref<5x20x64xf32, #tpu.memory_space<vmem>>, vector<1x20x64xf32>
    %22 = vector.shape_cast %21 : vector<1x20x64xf32> to vector<20x64xf32>
    %cst_24 = arith.constant dense<0.000000e+00> : vector<20x4xf32>
    %23 = tpu.matmul %22, %0, %cst_24 {dimension_numbers = #tpu.dot_dimension_numbers<[1], [0], [0], [1], [0, 0, 1, 1], [], []>} : vector<20x64xf32>, vector<64x4xf32>, vector<20x4xf32> -> vector<20x4xf32>
    %c3_25 = arith.constant 3 : index
    %c0_26 = arith.constant 0 : index
    %c0_27 = arith.constant 0 : index
    %24 = vector.load %arg2[%c3_25, %c0_26, %c0_27] : memref<5x4x8xf32, #tpu.memory_space<vmem>>, vector<1x4x8xf32>
    %25 = vector.shape_cast %24 : vector<1x4x8xf32> to vector<4x8xf32>
    %cst_28 = arith.constant dense<0.000000e+00> : vector<20x8xf32>
    %26 = tpu.matmul %23, %25, %cst_28 {dimension_numbers = #tpu.dot_dimension_numbers<[1], [0], [0], [1], [0, 0, 1, 1], [], []>} : vector<20x4xf32>, vector<4x8xf32>, vector<20x8xf32> -> vector<20x8xf32>
    %27 = arith.addf %20, %26 : vector<20x8xf32>
    %c4 = arith.constant 4 : index
    %c0_29 = arith.constant 0 : index
    %c0_30 = arith.constant 0 : index
    %28 = vector.load %arg1[%c4, %c0_29, %c0_30] : memref<5x20x64xf32, #tpu.memory_space<vmem>>, vector<1x20x64xf32>
    %29 = vector.shape_cast %28 : vector<1x20x64xf32> to vector<20x64xf32>
    %cst_31 = arith.constant dense<0.000000e+00> : vector<20x4xf32>
    %30 = tpu.matmul %29, %0, %cst_31 {dimension_numbers = #tpu.dot_dimension_numbers<[1], [0], [0], [1], [0, 0, 1, 1], [], []>} : vector<20x64xf32>, vector<64x4xf32>, vector<20x4xf32> -> vector<20x4xf32>
    %c4_32 = arith.constant 4 : index
    %c0_33 = arith.constant 0 : index
    %c0_34 = arith.constant 0 : index
    %31 = vector.load %arg2[%c4_32, %c0_33, %c0_34] : memref<5x4x8xf32, #tpu.memory_space<vmem>>, vector<1x4x8xf32>
    %32 = vector.shape_cast %31 : vector<1x4x8xf32> to vector<4x8xf32>
    %cst_35 = arith.constant dense<0.000000e+00> : vector<20x8xf32>
    %33 = tpu.matmul %30, %32, %cst_35 {dimension_numbers = #tpu.dot_dimension_numbers<[1], [0], [0], [1], [0, 0, 1, 1], [], []>} : vector<20x4xf32>, vector<4x8xf32>, vector<20x8xf32> -> vector<20x8xf32>
    %34 = arith.addf %27, %33 : vector<20x8xf32>
    %c0_36 = arith.constant 0 : index
    %c0_37 = arith.constant 0 : index
    %35 = vector.load %arg3[%c0_36, %c0_37] : memref<1x8xf32, #tpu.memory_space<vmem>>, vector<1x8xf32>
    %36 = vector.broadcast %35 : vector<1x8xf32> to vector<20x8xf32>
    %37 = arith.addf %34, %36 : vector<20x8xf32>
    %cst_38 = arith.constant 0.000000e+00 : f32
    %38 = vector.broadcast %cst_38 : f32 to vector<20x8xf32>
    %39 = arith.maximumf %37, %38 : vector<20x8xf32>
    %c0_39 = arith.constant 0 : index
    %c0_40 = arith.constant 0 : index
    %c0_41 = arith.constant 0 : index
    %40 = vector.load %arg4[%c0_39, %c0_40, %c0_41] : memref<5x4x20xf32, #tpu.memory_space<vmem>>, vector<1x4x20xf32>
    %41 = vector.shape_cast %40 : vector<1x4x20xf32> to vector<4x20xf32>
    %cst_42 = arith.constant dense<0.000000e+00> : vector<4x8xf32>
    %42 = tpu.matmul %41, %39, %cst_42 {dimension_numbers = #tpu.dot_dimension_numbers<[1], [0], [0], [1], [0, 0, 1, 1], [], []>} : vector<4x20xf32>, vector<20x8xf32>, vector<4x8xf32> -> vector<4x8xf32>
    %c0_43 = arith.constant 0 : index
    %c0_44 = arith.constant 0 : index
    %c0_45 = arith.constant 0 : index
    %43 = vector.load %arg5[%c0_43, %c0_44, %c0_45] : memref<5x8x16xf32, #tpu.memory_space<vmem>>, vector<1x8x16xf32>
    %44 = vector.shape_cast %43 : vector<1x8x16xf32> to vector<8x16xf32>
    %cst_46 = arith.constant dense<0.000000e+00> : vector<4x16xf32>
    %45 = tpu.matmul %42, %44, %cst_46 {dimension_numbers = #tpu.dot_dimension_numbers<[1], [0], [0], [1], [0, 0, 1, 1], [], []>} : vector<4x8xf32>, vector<8x16xf32>, vector<4x16xf32> -> vector<4x16xf32>
    %c1_47 = arith.constant 1 : index
    %c0_48 = arith.constant 0 : index
    %c0_49 = arith.constant 0 : index
    %46 = vector.load %arg4[%c1_47, %c0_48, %c0_49] : memref<5x4x20xf32, #tpu.memory_space<vmem>>, vector<1x4x20xf32>
    %47 = vector.shape_cast %46 : vector<1x4x20xf32> to vector<4x20xf32>
    %cst_50 = arith.constant dense<0.000000e+00> : vector<4x8xf32>
    %48 = tpu.matmul %47, %39, %cst_50 {dimension_numbers = #tpu.dot_dimension_numbers<[1], [0], [0], [1], [0, 0, 1, 1], [], []>} : vector<4x20xf32>, vector<20x8xf32>, vector<4x8xf32> -> vector<4x8xf32>
    %c1_51 = arith.constant 1 : index
    %c0_52 = arith.constant 0 : index
    %c0_53 = arith.constant 0 : index
    %49 = vector.load %arg5[%c1_51, %c0_52, %c0_53] : memref<5x8x16xf32, #tpu.memory_space<vmem>>, vector<1x8x16xf32>
    %50 = vector.shape_cast %49 : vector<1x8x16xf32> to vector<8x16xf32>
    %cst_54 = arith.constant dense<0.000000e+00> : vector<4x16xf32>
    %51 = tpu.matmul %48, %50, %cst_54 {dimension_numbers = #tpu.dot_dimension_numbers<[1], [0], [0], [1], [0, 0, 1, 1], [], []>} : vector<4x8xf32>, vector<8x16xf32>, vector<4x16xf32> -> vector<4x16xf32>
    %52 = arith.addf %45, %51 : vector<4x16xf32>
    %c2_55 = arith.constant 2 : index
    %c0_56 = arith.constant 0 : index
    %c0_57 = arith.constant 0 : index
    %53 = vector.load %arg4[%c2_55, %c0_56, %c0_57] : memref<5x4x20xf32, #tpu.memory_space<vmem>>, vector<1x4x20xf32>
    %54 = vector.shape_cast %53 : vector<1x4x20xf32> to vector<4x20xf32>
    %cst_58 = arith.constant dense<0.000000e+00> : vector<4x8xf32>
    %55 = tpu.matmul %54, %39, %cst_58 {dimension_numbers = #tpu.dot_dimension_numbers<[1], [0], [0], [1], [0, 0, 1, 1], [], []>} : vector<4x20xf32>, vector<20x8xf32>, vector<4x8xf32> -> vector<4x8xf32>
    %c2_59 = arith.constant 2 : index
    %c0_60 = arith.constant 0 : index
    %c0_61 = arith.constant 0 : index
    %56 = vector.load %arg5[%c2_59, %c0_60, %c0_61] : memref<5x8x16xf32, #tpu.memory_space<vmem>>, vector<1x8x16xf32>
    %57 = vector.shape_cast %56 : vector<1x8x16xf32> to vector<8x16xf32>
    %cst_62 = arith.constant dense<0.000000e+00> : vector<4x16xf32>
    %58 = tpu.matmul %55, %57, %cst_62 {dimension_numbers = #tpu.dot_dimension_numbers<[1], [0], [0], [1], [0, 0, 1, 1], [], []>} : vector<4x8xf32>, vector<8x16xf32>, vector<4x16xf32> -> vector<4x16xf32>
    %59 = arith.addf %52, %58 : vector<4x16xf32>
    %c3_63 = arith.constant 3 : index
    %c0_64 = arith.constant 0 : index
    %c0_65 = arith.constant 0 : index
    %60 = vector.load %arg4[%c3_63, %c0_64, %c0_65] : memref<5x4x20xf32, #tpu.memory_space<vmem>>, vector<1x4x20xf32>
    %61 = vector.shape_cast %60 : vector<1x4x20xf32> to vector<4x20xf32>
    %cst_66 = arith.constant dense<0.000000e+00> : vector<4x8xf32>
    %62 = tpu.matmul %61, %39, %cst_66 {dimension_numbers = #tpu.dot_dimension_numbers<[1], [0], [0], [1], [0, 0, 1, 1], [], []>} : vector<4x20xf32>, vector<20x8xf32>, vector<4x8xf32> -> vector<4x8xf32>
    %c3_67 = arith.constant 3 : index
    %c0_68 = arith.constant 0 : index
    %c0_69 = arith.constant 0 : index
    %63 = vector.load %arg5[%c3_67, %c0_68, %c0_69] : memref<5x8x16xf32, #tpu.memory_space<vmem>>, vector<1x8x16xf32>
    %64 = vector.shape_cast %63 : vector<1x8x16xf32> to vector<8x16xf32>
    %cst_70 = arith.constant dense<0.000000e+00> : vector<4x16xf32>
    %65 = tpu.matmul %62, %64, %cst_70 {dimension_numbers = #tpu.dot_dimension_numbers<[1], [0], [0], [1], [0, 0, 1, 1], [], []>} : vector<4x8xf32>, vector<8x16xf32>, vector<4x16xf32> -> vector<4x16xf32>
    %66 = arith.addf %59, %65 : vector<4x16xf32>
    %c4_71 = arith.constant 4 : index
    %c0_72 = arith.constant 0 : index
    %c0_73 = arith.constant 0 : index
    %67 = vector.load %arg4[%c4_71, %c0_72, %c0_73] : memref<5x4x20xf32, #tpu.memory_space<vmem>>, vector<1x4x20xf32>
    %68 = vector.shape_cast %67 : vector<1x4x20xf32> to vector<4x20xf32>
    %cst_74 = arith.constant dense<0.000000e+00> : vector<4x8xf32>
    %69 = tpu.matmul %68, %39, %cst_74 {dimension_numbers = #tpu.dot_dimension_numbers<[1], [0], [0], [1], [0, 0, 1, 1], [], []>} : vector<4x20xf32>, vector<20x8xf32>, vector<4x8xf32> -> vector<4x8xf32>
    %c4_75 = arith.constant 4 : index
    %c0_76 = arith.constant 0 : index
    %c0_77 = arith.constant 0 : index
    %70 = vector.load %arg5[%c4_75, %c0_76, %c0_77] : memref<5x8x16xf32, #tpu.memory_space<vmem>>, vector<1x8x16xf32>
    %71 = vector.shape_cast %70 : vector<1x8x16xf32> to vector<8x16xf32>
    %cst_78 = arith.constant dense<0.000000e+00> : vector<4x16xf32>
    %72 = tpu.matmul %69, %71, %cst_78 {dimension_numbers = #tpu.dot_dimension_numbers<[1], [0], [0], [1], [0, 0, 1, 1], [], []>} : vector<4x8xf32>, vector<8x16xf32>, vector<4x16xf32> -> vector<4x16xf32>
    %73 = arith.addf %66, %72 : vector<4x16xf32>
    %c0_79 = arith.constant 0 : index
    %c0_80 = arith.constant 0 : index
    %74 = vector.load %arg6[%c0_79, %c0_80] : memref<1x16xf32, #tpu.memory_space<vmem>>, vector<1x16xf32>
    %75 = vector.broadcast %74 : vector<1x16xf32> to vector<4x16xf32>
    %76 = arith.addf %73, %75 : vector<4x16xf32>
    %cst_81 = arith.constant 0.000000e+00 : f32
    %77 = vector.broadcast %cst_81 : f32 to vector<4x16xf32>
    %78 = arith.maximumf %76, %77 : vector<4x16xf32>
    %c0_82 = arith.constant 0 : index
    %c0_83 = arith.constant 0 : index
    %c0_84 = arith.constant 0 : index
    %79 = vector.load %arg7[%c0_82, %c0_83, %c0_84] : memref<2x2x4xf32, #tpu.memory_space<vmem>>, vector<1x2x4xf32>
    %80 = vector.shape_cast %79 : vector<1x2x4xf32> to vector<2x4xf32>
    %cst_85 = arith.constant dense<0.000000e+00> : vector<2x16xf32>
    %81 = tpu.matmul %80, %78, %cst_85 {dimension_numbers = #tpu.dot_dimension_numbers<[1], [0], [0], [1], [0, 0, 1, 1], [], []>} : vector<2x4xf32>, vector<4x16xf32>, vector<2x16xf32> -> vector<2x16xf32>
    %c0_86 = arith.constant 0 : index
    %c0_87 = arith.constant 0 : index
    %c0_88 = arith.constant 0 : index
    %82 = vector.load %arg8[%c0_86, %c0_87, %c0_88] : memref<2x16x16xf32, #tpu.memory_space<vmem>>, vector<1x16x16xf32>
    %83 = vector.shape_cast %82 : vector<1x16x16xf32> to vector<16x16xf32>
    %cst_89 = arith.constant dense<0.000000e+00> : vector<2x16xf32>
    %84 = tpu.matmul %81, %83, %cst_89 {dimension_numbers = #tpu.dot_dimension_numbers<[1], [0], [0], [1], [0, 0, 1, 1], [], []>} : vector<2x16xf32>, vector<16x16xf32>, vector<2x16xf32> -> vector<2x16xf32>
    %c1_90 = arith.constant 1 : index
    %c0_91 = arith.constant 0 : index
    %c0_92 = arith.constant 0 : index
    %85 = vector.load %arg7[%c1_90, %c0_91, %c0_92] : memref<2x2x4xf32, #tpu.memory_space<vmem>>, vector<1x2x4xf32>
    %86 = vector.shape_cast %85 : vector<1x2x4xf32> to vector<2x4xf32>
    %cst_93 = arith.constant dense<0.000000e+00> : vector<2x16xf32>
    %87 = tpu.matmul %86, %78, %cst_93 {dimension_numbers = #tpu.dot_dimension_numbers<[1], [0], [0], [1], [0, 0, 1, 1], [], []>} : vector<2x4xf32>, vector<4x16xf32>, vector<2x16xf32> -> vector<2x16xf32>
    %c1_94 = arith.constant 1 : index
    %c0_95 = arith.constant 0 : index
    %c0_96 = arith.constant 0 : index
    %88 = vector.load %arg8[%c1_94, %c0_95, %c0_96] : memref<2x16x16xf32, #tpu.memory_space<vmem>>, vector<1x16x16xf32>
    %89 = vector.shape_cast %88 : vector<1x16x16xf32> to vector<16x16xf32>
    %cst_97 = arith.constant dense<0.000000e+00> : vector<2x16xf32>
    %90 = tpu.matmul %87, %89, %cst_97 {dimension_numbers = #tpu.dot_dimension_numbers<[1], [0], [0], [1], [0, 0, 1, 1], [], []>} : vector<2x16xf32>, vector<16x16xf32>, vector<2x16xf32> -> vector<2x16xf32>
    %91 = arith.addf %84, %90 : vector<2x16xf32>
    %c0_98 = arith.constant 0 : index
    %c0_99 = arith.constant 0 : index
    %92 = vector.load %arg9[%c0_98, %c0_99] : memref<1x16xf32, #tpu.memory_space<vmem>>, vector<1x16xf32>
    %93 = vector.broadcast %92 : vector<1x16xf32> to vector<2x16xf32>
    %94 = arith.addf %91, %93 : vector<2x16xf32>
    %95 = math.tanh %94 : vector<2x16xf32>
    %c0_100 = arith.constant 0 : index
    %c0_101 = arith.constant 0 : index
    %96 = vector.load %arg10[%c0_100, %c0_101] : memref<16x8xf32, #tpu.memory_space<vmem>>, vector<16x8xf32>
    %cst_102 = arith.constant dense<0.000000e+00> : vector<2x8xf32>
    %97 = tpu.matmul %95, %96, %cst_102 {dimension_numbers = #tpu.dot_dimension_numbers<[1], [0], [0], [1], [0, 0, 1, 1], [], []>} : vector<2x16xf32>, vector<16x8xf32>, vector<2x8xf32> -> vector<2x8xf32>
    %c0_103 = arith.constant 0 : index
    %c0_104 = arith.constant 0 : index
    %98 = vector.load %arg11[%c0_103, %c0_104] : memref<1x8xf32, #tpu.memory_space<vmem>>, vector<1x8xf32>
    %99 = vector.broadcast %98 : vector<1x8xf32> to vector<2x8xf32>
    %100 = arith.addf %97, %99 : vector<2x8xf32>
    %c0_105 = arith.constant 0 : index
    %c0_106 = arith.constant 0 : index
    %101 = vector.load %arg12[%c0_105, %c0_106] : memref<2x8xf32, #tpu.memory_space<vmem>>, vector<2x8xf32>
    tpu.vector_store %arg12[%c0_105, %c0_106], %100 {strides = array<i32>} : memref<2x8xf32, #tpu.memory_space<vmem>>, vector<2x8xf32>,
    return
  }
}

</mosaic_0001>

<llo_original>
// kernel: encoder_cnnet1d_forward.1
$region0: #{encoder_cnnet1d_forward.1}
  #allocation0 [shape = 'u32[]', space=smem, size = 0x4, offset = 0x4, fixed_abs, tag = 'smem constant byte address 0x4 - core index']
  #allocation1 [shape = 'u32[72,128]{1,0:T(1,128)}', space=vmem, size = 0x9000, scoped, tag = 'internal scratch']
  %s0 = inlined_call_operand.vmem [shape: f32[64,4], index: 0, kind: input, shape index: {}]
  %s1 = inlined_call_operand.hbm [shape: f32[5,20,64], index: 1, kind: input, shape index: {}]
  %s2 = inlined_call_operand.hbm [shape: f32[5,4,8], index: 2, kind: input, shape index: {}]
  %s3 = inlined_call_operand.vmem [shape: f32[1,8], index: 3, kind: input, shape index: {}]
  %s4 = inlined_call_operand.vmem [shape: f32[5,4,20], index: 4, kind: input, shape index: {}]
  %s5 = inlined_call_operand.vmem [shape: f32[5,8,16], index: 5, kind: input, shape index: {}]
  %s6 = inlined_call_operand.vmem [shape: f32[1,16], index: 6, kind: input, shape index: {}]
  %s7 = inlined_call_operand.vmem [shape: f32[2,2,4], index: 7, kind: input, shape index: {}]
  %s8 = inlined_call_operand.vmem [shape: f32[2,16,16], index: 8, kind: input, shape index: {}]
  %s9 = inlined_call_operand.hbm [shape: f32[1,16], index: 9, kind: input, shape index: {}]
  %s10 = inlined_call_operand.vmem [shape: f32[16,8], index: 10, kind: input, shape index: {}]
  %s11 = inlined_call_operand.hbm [shape: f32[1,8], index: 11, kind: input, shape index: {}]
  %s12 = inlined_call_operand.hbm [shape: f32[2,8], index: 12, kind: output, shape index: {}]
  %s13 = sld [smem:[#allocation0]]
  $region74: #{encoder_cnnet1d_forward.1} parent=0
    _
  %s15 = ssub.s32 1, %s13
  %s16 = scalar_select 0, %s15, %s13
  $region1: #{encoder_cnnet1d_forward.1} parent=0
    #allocation2 [shape = 'u8[61440]{0}', space=vmem, size = 0xf000, scoped, tag = 'input window, operand 1, single buffered']
    #allocation3 [shape = 's32[1]{0}', space=sflag, size = 0x4, scoped, tag = 'scoped memory for encoder_cnnet1d_forward.1']
    #allocation4 [shape = 's32[1]{0}', space=sflag, size = 0x4, scoped, tag = 'scoped memory for encoder_cnnet1d_forward.1']
    #allocation5 [shape = 'u8[10240]{0}', space=vmem, size = 0x2800, scoped, tag = 'input window, operand 2, single buffered']
    #allocation6 [shape = 's32[1]{0}', space=sflag, size = 0x4, scoped, tag = 'scoped memory for encoder_cnnet1d_forward.1']
    #allocation7 [shape = 'u8[512]{0}', space=vmem, size = 0x400, scoped, tag = 'input window, operand 9, single buffered']
    #allocation8 [shape = 'u8[512]{0}', space=vmem, size = 0x400, scoped, tag = 'input window, operand 11, single buffered']
    #allocation9 [shape = 's32[1]{0}', space=sflag, size = 0x4, scoped, tag = 'scoped memory for encoder_cnnet1d_forward.1']
    #allocation10 [shape = 'u8[1024]{0}', space=vmem, size = 0x400, scoped, tag = 'output window, operand 0, single buffered']
    %17 = vsyncpa [#allocation3], 0
    %18 = vsyncpa [#allocation6], 0
    %19 = vsyncpa [#allocation9], 0
    %20 = vsyncpa [#allocation4], 0
    // Predicated region
    $region2: #{encoder_cnnet1d_forward.1} parent=1 // pred_check
      _
    $region3: #{encoder_cnnet1d_forward.1} parent=1 // pred_check_branch
      %22 = sbr.rel (0) target = $region5
    $region4: #{encoder_cnnet1d_forward.1} parent=1 // pred_region
      _
    $region5: #{encoder_cnnet1d_forward.1} parent=1 // pred_fallthru
      _
    // Predicated region
    $region6: #{encoder_cnnet1d_forward.1} parent=1 // pred_check
      _
    $region7: #{encoder_cnnet1d_forward.1} parent=1 // pred_check_branch
      %24 = sbr.rel (0) target = $region9
    $region8: #{encoder_cnnet1d_forward.1} parent=1 // pred_region
      %26 = vsyncadd [#allocation3], 0
      %s27 = sshll.u32 %s1, 4
      %s28 = int_to_ptr.hbm [resolvable:$true] %s27
      %s29 = sshll.u32 [#allocation2], 4
      %s30 = int_to_ptr.vmem [resolvable:$true] %s29
      %35 = dma.hbm_to_vmem [thread:$0]  %s28, 1920, %s30, [#allocation3], 128, 128, 8
    $region9: #{encoder_cnnet1d_forward.1} parent=1 // pred_fallthru
      _
    // Predicated region
    $region10: #{encoder_cnnet1d_forward.1} parent=1 // pred_check
      _
    $region11: #{encoder_cnnet1d_forward.1} parent=1 // pred_check_branch
      %37 = sbr.rel (0) target = $region13
    $region12: #{encoder_cnnet1d_forward.1} parent=1 // pred_region
      %39 = vsyncadd [#allocation6], 0
      %s40 = sshll.u32 %s2, 4
      %s41 = int_to_ptr.hbm [resolvable:$true] %s40
      %s42 = sshll.u32 [#allocation5], 4
      %s43 = int_to_ptr.vmem [resolvable:$true] %s42
      %48 = dma.hbm_to_vmem [thread:$0]  %s41, 320, %s43, [#allocation6], 64, 64, 4
    $region13: #{encoder_cnnet1d_forward.1} parent=1 // pred_fallthru
      _
    // Predicated region
    $region14: #{encoder_cnnet1d_forward.1} parent=1 // pred_check
      _
    $region15: #{encoder_cnnet1d_forward.1} parent=1 // pred_check_branch
      %50 = sbr.rel (0) target = $region17
    $region16: #{encoder_cnnet1d_forward.1} parent=1 // pred_region
      _
    $region17: #{encoder_cnnet1d_forward.1} parent=1 // pred_fallthru
      _
    // Predicated region
    $region18: #{encoder_cnnet1d_forward.1} parent=1 // pred_check
      _
    $region19: #{encoder_cnnet1d_forward.1} parent=1 // pred_check_branch
      %52 = sbr.rel (0) target = $region21
    $region20: #{encoder_cnnet1d_forward.1} parent=1 // pred_region
      _
    $region21: #{encoder_cnnet1d_forward.1} parent=1 // pred_fallthru
      _
    // Predicated region
    $region22: #{encoder_cnnet1d_forward.1} parent=1 // pred_check
      _
    $region23: #{encoder_cnnet1d_forward.1} parent=1 // pred_check_branch
      %54 = sbr.rel (0) target = $region25
    $region24: #{encoder_cnnet1d_forward.1} parent=1 // pred_region
      _
    $region25: #{encoder_cnnet1d_forward.1} parent=1 // pred_fallthru
      _
    // Predicated region
    $region26: #{encoder_cnnet1d_forward.1} parent=1 // pred_check
      _
    $region27: #{encoder_cnnet1d_forward.1} parent=1 // pred_check_branch
      %56 = sbr.rel (0) target = $region29
    $region28: #{encoder_cnnet1d_forward.1} parent=1 // pred_region
      _
    $region29: #{encoder_cnnet1d_forward.1} parent=1 // pred_fallthru
      _
    // Predicated region
    $region30: #{encoder_cnnet1d_forward.1} parent=1 // pred_check
      _
    $region31: #{encoder_cnnet1d_forward.1} parent=1 // pred_check_branch
      %58 = sbr.rel (0) target = $region33
    $region32: #{encoder_cnnet1d_forward.1} parent=1 // pred_region
      _
    $region33: #{encoder_cnnet1d_forward.1} parent=1 // pred_fallthru
      _
    // Predicated region
    $region34: #{encoder_cnnet1d_forward.1} parent=1 // pred_check
      _
    $region35: #{encoder_cnnet1d_forward.1} parent=1 // pred_check_branch
      %60 = sbr.rel (0) target = $region37
    $region36: #{encoder_cnnet1d_forward.1} parent=1 // pred_region
      _
    $region37: #{encoder_cnnet1d_forward.1} parent=1 // pred_fallthru
      _
    // Predicated region
    $region38: #{encoder_cnnet1d_forward.1} parent=1 // pred_check
      _
    $region39: #{encoder_cnnet1d_forward.1} parent=1 // pred_check_branch
      %62 = sbr.rel (0) target = $region41
    $region40: #{encoder_cnnet1d_forward.1} parent=1 // pred_region
      %64 = vsyncadd [#allocation6], 0
      %s66 = sshll.u32 %s9, 4
      %s67 = int_to_ptr.hbm [resolvable:$true] %s66
      %s68 = sshll.u32 [#allocation7], 4
      %s69 = int_to_ptr.vmem [resolvable:$true] %s68
      %71 = dma.hbm_to_vmem [thread:$0]  %s67, 16, %s69, [#allocation6]
    $region41: #{encoder_cnnet1d_forward.1} parent=1 // pred_fallthru
      _
    // Predicated region
    $region42: #{encoder_cnnet1d_forward.1} parent=1 // pred_check
      _
    $region43: #{encoder_cnnet1d_forward.1} parent=1 // pred_check_branch
      %73 = sbr.rel (0) target = $region45
    $region44: #{encoder_cnnet1d_forward.1} parent=1 // pred_region
      _
    $region45: #{encoder_cnnet1d_forward.1} parent=1 // pred_fallthru
      _
    // Predicated region
    $region46: #{encoder_cnnet1d_forward.1} parent=1 // pred_check
      _
    $region47: #{encoder_cnnet1d_forward.1} parent=1 // pred_check_branch
      %75 = sbr.rel (0) target = $region49
    $region48: #{encoder_cnnet1d_forward.1} parent=1 // pred_region
      %77 = vsyncadd [#allocation9], 0
      %s79 = sshll.u32 %s11, 4
      %s80 = int_to_ptr.hbm [resolvable:$true] %s79
      %s81 = sshll.u32 [#allocation8], 4
      %s82 = int_to_ptr.vmem [resolvable:$true] %s81
      %84 = dma.hbm_to_vmem [thread:$0]  %s80, 16, %s82, [#allocation9]
    $region49: #{encoder_cnnet1d_forward.1} parent=1 // pred_fallthru
      _
    // Predicated region
    $region50: #{encoder_cnnet1d_forward.1} parent=1 // pred_check
      _
    $region51: #{encoder_cnnet1d_forward.1} parent=1 // pred_check_branch
      %86 = sbr.rel (0) target = $region53
    $region52: #{encoder_cnnet1d_forward.1} parent=1 // pred_region
      %88 = dma.done [#allocation3], 1920
    $region53: #{encoder_cnnet1d_forward.1} parent=1 // pred_fallthru
      _
    // Predicated region
    $region54: #{encoder_cnnet1d_forward.1} parent=1 // pred_check
      _
    $region55: #{encoder_cnnet1d_forward.1} parent=1 // pred_check_branch
      %90 = sbr.rel (0) target = $region57
    $region56: #{encoder_cnnet1d_forward.1} parent=1 // pred_region
      %92 = dma.done [#allocation6], 320
    $region57: #{encoder_cnnet1d_forward.1} parent=1 // pred_fallthru
      _
    // Predicated region
    $region58: #{encoder_cnnet1d_forward.1} parent=1 // pred_check
      _
    $region59: #{encoder_cnnet1d_forward.1} parent=1 // pred_check_branch
      %94 = sbr.rel (0) target = $region61
    $region60: #{encoder_cnnet1d_forward.1} parent=1 // pred_region
      %96 = dma.done [#allocation6], 16
    $region61: #{encoder_cnnet1d_forward.1} parent=1 // pred_fallthru
      _
    // Predicated region
    $region62: #{encoder_cnnet1d_forward.1} parent=1 // pred_check
      _
    $region63: #{encoder_cnnet1d_forward.1} parent=1 // pred_check_branch
      %98 = sbr.rel (0) target = $region65
    $region64: #{encoder_cnnet1d_forward.1} parent=1 // pred_region
      %100 = dma.done [#allocation9], 16
    $region65: #{encoder_cnnet1d_forward.1} parent=1 // pred_fallthru
      _
    %v101 = vld [vmem:[%s0] sm:$0xff]
    %v102 = vld [vmem:[%s0 + $0x8] sm:$0xff]
    %v103 = vld [vmem:[%s0 + $0x10] sm:$0xff]
    %v104 = vld [vmem:[%s0 + $0x18] sm:$0xff]
    %v105 = vld [vmem:[%s0 + $0x20] sm:$0xff]
    %v106 = vld [vmem:[%s0 + $0x28] sm:$0xff]
    %v107 = vld [vmem:[%s0 + $0x30] sm:$0xff]
    %v108 = vld [vmem:[%s0 + $0x38] sm:$0xff]
    %v109 = vld [vmem:[#allocation2] sm:$0xff]
    %v110 = vld [vmem:[#allocation2 + $0x8] sm:$0xff]
    %v111 = vld [vmem:[#allocation2 + $0x10] sm:$0xf]
    %vm112 = vcmask 523264
    %v114 = vsel %vm112, %v109, 0
    %v117 = vsel %vm112, %v110, 0
    %v120 = vsel %vm112, %v111, 0
    %122 = vmatpush.msra.mxu0 0.0
    %123 = vmatpush.msra.mxu0 0.0
    %124 = vmatpush.msra.mxu0 0.0
    %125 = vmatpush.msra.mxu0 0.0
    %126 = vmatpush.msra.mxu0 0.0
    %127 = vmatpush.msra.mxu0 0.0
    %128 = vmatpush.msra.mxu0 0.0
    %129 = vmatpush.msra.mxu0 0.0
    %130 = vmatpush.msra.mxu0 %v108
    %131 = vmatpush.msra.mxu0 %v107
    %132 = vmatpush.msra.mxu0 %v106
    %133 = vmatpush.msra.mxu0 %v105
    %134 = vmatpush.msra.mxu0 %v104
    %135 = vmatpush.msra.mxu0 %v103
    %136 = vmatpush.msra.mxu0 %v102
    %137 = vmatpush.msra.mxu0 %v101
    %138 = vmatmul.f32.gmra.mxu0 %v114
    %v139 = vpop.f32.mrf.mxu0
    %v140 = vadd.f32 0.0, %v139
    %141 = vmatmul.f32.gmra.mxu0 %v117
    %v142 = vpop.f32.mrf.mxu0
    %v143 = vadd.f32 0.0, %v142
    %144 = vmatmul.f32.gmra.mxu0 %v120
    %v145 = vpop.f32.mrf.mxu0
    %v146 = vadd.f32 0.0, %v145
    %147 = vdwg.mxu0
    %v148 = vld [vmem:[#allocation5] sm:$0xf]
    %s149 = scalar_lea.vmem [#allocation2], 24
    %v150 = vld [vmem:[%s149] sm:$0xff]
    %v151 = vld [vmem:[%s149 + $0x8] sm:$0xff]
    %v152 = vld [vmem:[%s149 + $0x10] sm:$0xf]
    %v154 = vsel %vm112, %v150, 0
    %v157 = vsel %vm112, %v151, 0
    %v160 = vsel %vm112, %v152, 0
    %162 = vmatpush.msra.mxu0 0.0
    %163 = vmatpush.msra.mxu0 0.0
    %164 = vmatpush.msra.mxu0 0.0
    %165 = vmatpush.msra.mxu0 0.0
    %166 = vmatpush.msra.mxu0 0.0
    %167 = vmatpush.msra.mxu0 0.0
    %168 = vmatpush.msra.mxu0 0.0
    %169 = vmatpush.msra.mxu0 0.0
    %170 = vmatpush.msra.mxu0 %v108
    %171 = vmatpush.msra.mxu0 %v107
    %172 = vmatpush.msra.mxu0 %v106
    %173 = vmatpush.msra.mxu0 %v105
    %174 = vmatpush.msra.mxu0 %v104
    %175 = vmatpush.msra.mxu0 %v103
    %176 = vmatpush.msra.mxu0 %v102
    %177 = vmatpush.msra.mxu0 %v101
    %178 = vmatmul.f32.gmra.mxu0 %v154
    %v179 = vpop.f32.mrf.mxu0
    %v180 = vadd.f32 0.0, %v179
    %181 = vmatmul.f32.gmra.mxu0 %v157
    %v182 = vpop.f32.mrf.mxu0
    %v183 = vadd.f32 0.0, %v182
    %184 = vmatmul.f32.gmra.mxu0 %v160
    %v185 = vpop.f32.mrf.mxu0
    %v186 = vadd.f32 0.0, %v185
    %187 = vdwg.mxu0
    %s188 = scalar_lea.vmem [#allocation5], 4
    %v189 = vld [vmem:[%s188] sm:$0xf]
    %vm190 = vcmask 31744
    %v192 = vsel %vm190, %v180, 0
    %v195 = vsel %vm190, %v183, 0
    %v198 = vsel %vm190, %v186, 0
    %vm200 = vcmask 1043456
    %v202 = vsel %vm200, %v189, 0
    %204 = vmatpush.msra.mxu0 0.0
    %205 = vmatpush.msra.mxu0 0.0
    %206 = vmatpush.msra.mxu0 0.0
    %207 = vmatpush.msra.mxu0 0.0
    %208 = vmatpush.msra.mxu0 0.0
    %209 = vmatpush.msra.mxu0 0.0
    %210 = vmatpush.msra.mxu0 0.0
    %211 = vmatpush.msra.mxu0 0.0
    %212 = vmatpush.msra.mxu0 0.0
    %213 = vmatpush.msra.mxu0 0.0
    %214 = vmatpush.msra.mxu0 0.0
    %215 = vmatpush.msra.mxu0 0.0
    %216 = vmatpush.msra.mxu0 0.0
    %217 = vmatpush.msra.mxu0 0.0
    %218 = vmatpush.msra.mxu0 0.0
    %219 = vmatpush.msra.mxu0 %v202
    %220 = vmatmul.f32.gmra.mxu0 %v192
    %v221 = vpop.f32.mrf.mxu0
    %v222 = vadd.f32 0.0, %v221
    %223 = vmatmul.f32.gmra.mxu0 %v195
    %v224 = vpop.f32.mrf.mxu0
    %v225 = vadd.f32 0.0, %v224
    %226 = vmatmul.f32.gmra.mxu0 %v198
    %v227 = vpop.f32.mrf.mxu0
    %v228 = vadd.f32 0.0, %v227
    %229 = vdwg.mxu0
    %v231 = vsel %vm190, %v140, 0
    %v234 = vsel %vm190, %v143, 0
    %v237 = vsel %vm190, %v146, 0
    %v240 = vsel %vm200, %v148, 0
    %242 = vmatpush.msra.mxu0 0.0
    %243 = vmatpush.msra.mxu0 0.0
    %244 = vmatpush.msra.mxu0 0.0
    %245 = vmatpush.msra.mxu0 0.0
    %246 = vmatpush.msra.mxu0 0.0
    %247 = vmatpush.msra.mxu0 0.0
    %248 = vmatpush.msra.mxu0 0.0
    %249 = vmatpush.msra.mxu0 0.0
    %250 = vmatpush.msra.mxu0 0.0
    %251 = vmatpush.msra.mxu0 0.0
    %252 = vmatpush.msra.mxu0 0.0
    %253 = vmatpush.msra.mxu0 0.0
    %254 = vmatpush.msra.mxu0 0.0
    %255 = vmatpush.msra.mxu0 0.0
    %256 = vmatpush.msra.mxu0 0.0
    %257 = vmatpush.msra.mxu0 %v240
    %258 = vmatmul.f32.gmra.mxu0 %v231
    %v259 = vpop.f32.mrf.mxu0
    %v260 = vadd.f32 %v222, %v259
    %261 = vmatmul.f32.gmra.mxu0 %v234
    %v262 = vpop.f32.mrf.mxu0
    %v263 = vadd.f32 %v225, %v262
    %264 = vmatmul.f32.gmra.mxu0 %v237
    %v265 = vpop.f32.mrf.mxu0
    %v266 = vadd.f32 %v228, %v265
    %267 = vdwg.mxu0
    %s268 = scalar_lea.vmem [#allocation2], 48
    %v269 = vld [vmem:[%s268] sm:$0xff]
    %v270 = vld [vmem:[%s268 + $0x8] sm:$0xff]
    %v271 = vld [vmem:[%s268 + $0x10] sm:$0xf]
    %v273 = vsel %vm112, %v269, 0
    %v276 = vsel %vm112, %v270, 0
    %v279 = vsel %vm112, %v271, 0
    %281 = vmatpush.msra.mxu0 0.0
    %282 = vmatpush.msra.mxu0 0.0
    %283 = vmatpush.msra.mxu0 0.0
    %284 = vmatpush.msra.mxu0 0.0
    %285 = vmatpush.msra.mxu0 0.0
    %286 = vmatpush.msra.mxu0 0.0
    %287 = vmatpush.msra.mxu0 0.0
    %288 = vmatpush.msra.mxu0 0.0
    %289 = vmatpush.msra.mxu0 %v108
    %290 = vmatpush.msra.mxu0 %v107
    %291 = vmatpush.msra.mxu0 %v106
    %292 = vmatpush.msra.mxu0 %v105
    %293 = vmatpush.msra.mxu0 %v104
    %294 = vmatpush.msra.mxu0 %v103
    %295 = vmatpush.msra.mxu0 %v102
    %296 = vmatpush.msra.mxu0 %v101
    %297 = vmatmul.f32.gmra.mxu0 %v273
    %v298 = vpop.f32.mrf.mxu0
    %v299 = vadd.f32 0.0, %v298
    %300 = vmatmul.f32.gmra.mxu0 %v276
    %v301 = vpop.f32.mrf.mxu0
    %v302 = vadd.f32 0.0, %v301
    %303 = vmatmul.f32.gmra.mxu0 %v279
    %v304 = vpop.f32.mrf.mxu0
    %v305 = vadd.f32 0.0, %v304
    %306 = vdwg.mxu0
    %s307 = scalar_lea.vmem [#allocation5], 8
    %v308 = vld [vmem:[%s307] sm:$0xf]
    %v310 = vsel %vm190, %v299, 0
    %v313 = vsel %vm190, %v302, 0
    %v316 = vsel %vm190, %v305, 0
    %v319 = vsel %vm200, %v308, 0
    %321 = vmatpush.msra.mxu0 0.0
    %322 = vmatpush.msra.mxu0 0.0
    %323 = vmatpush.msra.mxu0 0.0
    %324 = vmatpush.msra.mxu0 0.0
    %325 = vmatpush.msra.mxu0 0.0
    %326 = vmatpush.msra.mxu0 0.0
    %327 = vmatpush.msra.mxu0 0.0
    %328 = vmatpush.msra.mxu0 0.0
    %329 = vmatpush.msra.mxu0 0.0
    %330 = vmatpush.msra.mxu0 0.0
    %331 = vmatpush.msra.mxu0 0.0
    %332 = vmatpush.msra.mxu0 0.0
    %333 = vmatpush.msra.mxu0 0.0
    %334 = vmatpush.msra.mxu0 0.0
    %335 = vmatpush.msra.mxu0 0.0
    %336 = vmatpush.msra.mxu0 %v319
    %337 = vmatmul.f32.gmra.mxu0 %v310
    %v338 = vpop.f32.mrf.mxu0
    %v339 = vadd.f32 0.0, %v338
    %340 = vmatmul.f32.gmra.mxu0 %v313
    %v341 = vpop.f32.mrf.mxu0
    %v342 = vadd.f32 0.0, %v341
    %343 = vmatmul.f32.gmra.mxu0 %v316
    %v344 = vpop.f32.mrf.mxu0
    %v345 = vadd.f32 0.0, %v344
    %346 = vdwg.mxu0
    %v347 = vadd.f32 %v260, %v339
    %v348 = vadd.f32 %v263, %v342
    %v349 = vadd.f32 %v266, %v345
    %s350 = scalar_lea.vmem [#allocation2], 72
    %v351 = vld [vmem:[%s350] sm:$0xff]
    %v352 = vld [vmem:[%s350 + $0x8] sm:$0xff]
    %v353 = vld [vmem:[%s350 + $0x10] sm:$0xf]
    %v355 = vsel %vm112, %v351, 0
    %v358 = vsel %vm112, %v352, 0
    %v361 = vsel %vm112, %v353, 0
    %363 = vmatpush.msra.mxu0 0.0
    %364 = vmatpush.msra.mxu0 0.0
    %365 = vmatpush.msra.mxu0 0.0
    %366 = vmatpush.msra.mxu0 0.0
    %367 = vmatpush.msra.mxu0 0.0
    %368 = vmatpush.msra.mxu0 0.0
    %369 = vmatpush.msra.mxu0 0.0
    %370 = vmatpush.msra.mxu0 0.0
    %371 = vmatpush.msra.mxu0 %v108
    %372 = vmatpush.msra.mxu0 %v107
    %373 = vmatpush.msra.mxu0 %v106
    %374 = vmatpush.msra.mxu0 %v105
    %375 = vmatpush.msra.mxu0 %v104
    %376 = vmatpush.msra.mxu0 %v103
    %377 = vmatpush.msra.mxu0 %v102
    %378 = vmatpush.msra.mxu0 %v101
    %379 = vmatmul.f32.gmra.mxu0 %v355
    %v380 = vpop.f32.mrf.mxu0
    %v381 = vadd.f32 0.0, %v380
    %382 = vmatmul.f32.gmra.mxu0 %v358
    %v383 = vpop.f32.mrf.mxu0
    %v384 = vadd.f32 0.0, %v383
    %385 = vmatmul.f32.gmra.mxu0 %v361
    %v386 = vpop.f32.mrf.mxu0
    %v387 = vadd.f32 0.0, %v386
    %388 = vdwg.mxu0
    %s389 = scalar_lea.vmem [#allocation5], 12
    %v390 = vld [vmem:[%s389] sm:$0xf]
    %v392 = vsel %vm190, %v381, 0
    %v395 = vsel %vm190, %v384, 0
    %v398 = vsel %vm190, %v387, 0
    %v401 = vsel %vm200, %v390, 0
    %403 = vmatpush.msra.mxu0 0.0
    %404 = vmatpush.msra.mxu0 0.0
    %405 = vmatpush.msra.mxu0 0.0
    %406 = vmatpush.msra.mxu0 0.0
    %407 = vmatpush.msra.mxu0 0.0
    %408 = vmatpush.msra.mxu0 0.0
    %409 = vmatpush.msra.mxu0 0.0
    %410 = vmatpush.msra.mxu0 0.0
    %411 = vmatpush.msra.mxu0 0.0
    %412 = vmatpush.msra.mxu0 0.0
    %413 = vmatpush.msra.mxu0 0.0
    %414 = vmatpush.msra.mxu0 0.0
    %415 = vmatpush.msra.mxu0 0.0
    %416 = vmatpush.msra.mxu0 0.0
    %417 = vmatpush.msra.mxu0 0.0
    %418 = vmatpush.msra.mxu0 %v401
    %419 = vmatmul.f32.gmra.mxu0 %v392
    %v420 = vpop.f32.mrf.mxu0
    %v421 = vadd.f32 0.0, %v420
    %422 = vmatmul.f32.gmra.mxu0 %v395
    %v423 = vpop.f32.mrf.mxu0
    %v424 = vadd.f32 0.0, %v423
    %425 = vmatmul.f32.gmra.mxu0 %v398
    %v426 = vpop.f32.mrf.mxu0
    %v427 = vadd.f32 0.0, %v426
    %428 = vdwg.mxu0
    %v429 = vadd.f32 %v347, %v421
    %v430 = vadd.f32 %v348, %v424
    %v431 = vadd.f32 %v349, %v427
    %s432 = scalar_lea.vmem [#allocation2], 96
    %v433 = vld [vmem:[%s432] sm:$0xff]
    %v434 = vld [vmem:[%s432 + $0x8] sm:$0xff]
    %v435 = vld [vmem:[%s432 + $0x10] sm:$0xf]
    %v437 = vsel %vm112, %v433, 0
    %v440 = vsel %vm112, %v434, 0
    %v443 = vsel %vm112, %v435, 0
    %445 = vmatpush.msra.mxu0 0.0
    %446 = vmatpush.msra.mxu0 0.0
    %447 = vmatpush.msra.mxu0 0.0
    %448 = vmatpush.msra.mxu0 0.0
    %449 = vmatpush.msra.mxu0 0.0
    %450 = vmatpush.msra.mxu0 0.0
    %451 = vmatpush.msra.mxu0 0.0
    %452 = vmatpush.msra.mxu0 0.0
    %453 = vmatpush.msra.mxu0 %v108
    %454 = vmatpush.msra.mxu0 %v107
    %455 = vmatpush.msra.mxu0 %v106
    %456 = vmatpush.msra.mxu0 %v105
    %457 = vmatpush.msra.mxu0 %v104
    %458 = vmatpush.msra.mxu0 %v103
    %459 = vmatpush.msra.mxu0 %v102
    %460 = vmatpush.msra.mxu0 %v101
    %461 = vmatmul.f32.gmra.mxu0 %v437
    %v462 = vpop.f32.mrf.mxu0
    %v463 = vadd.f32 0.0, %v462
    %464 = vmatmul.f32.gmra.mxu0 %v440
    %v465 = vpop.f32.mrf.mxu0
    %v466 = vadd.f32 0.0, %v465
    %467 = vmatmul.f32.gmra.mxu0 %v443
    %v468 = vpop.f32.mrf.mxu0
    %v469 = vadd.f32 0.0, %v468
    %470 = vdwg.mxu0
    %s471 = scalar_lea.vmem [#allocation5], 16
    %v472 = vld [vmem:[%s471] sm:$0xf]
    %v474 = vsel %vm190, %v463, 0
    %v477 = vsel %vm190, %v466, 0
    %v480 = vsel %vm190, %v469, 0
    %v483 = vsel %vm200, %v472, 0
    %485 = vmatpush.msra.mxu0 0.0
    %486 = vmatpush.msra.mxu0 0.0
    %487 = vmatpush.msra.mxu0 0.0
    %488 = vmatpush.msra.mxu0 0.0
    %489 = vmatpush.msra.mxu0 0.0
    %490 = vmatpush.msra.mxu0 0.0
    %491 = vmatpush.msra.mxu0 0.0
    %492 = vmatpush.msra.mxu0 0.0
    %493 = vmatpush.msra.mxu0 0.0
    %494 = vmatpush.msra.mxu0 0.0
    %495 = vmatpush.msra.mxu0 0.0
    %496 = vmatpush.msra.mxu0 0.0
    %497 = vmatpush.msra.mxu0 0.0
    %498 = vmatpush.msra.mxu0 0.0
    %499 = vmatpush.msra.mxu0 0.0
    %500 = vmatpush.msra.mxu0 %v483
    %501 = vmatmul.f32.gmra.mxu0 %v474
    %v502 = vpop.f32.mrf.mxu0
    %v503 = vadd.f32 0.0, %v502
    %504 = vmatmul.f32.gmra.mxu0 %v477
    %v505 = vpop.f32.mrf.mxu0
    %v506 = vadd.f32 0.0, %v505
    %507 = vmatmul.f32.gmra.mxu0 %v480
    %v508 = vpop.f32.mrf.mxu0
    %v509 = vadd.f32 0.0, %v508
    %510 = vdwg.mxu0
    %v511 = vadd.f32 %v429, %v503
    %v512 = vadd.f32 %v430, %v506
    %v513 = vadd.f32 %v431, %v509
    %v514 = vld [vmem:[%s3] sm:$0x1]
    %v516 = vperm.slane %v514, 0
    %v518 = vadd.f32 %v511, %v516
    %v519 = vadd.f32 %v512, %v516
    %v520 = vadd.f32 %v513, %v516
    %v521 = vmax.f32 %v518, 0.0
    %v522 = vmax.f32 %v519, 0.0
    %v523 = vmax.f32 %v520, 0.0
    %v524 = vld [vmem:[%s4] sm:$0xf]
    %vm525 = vcmask 162816
    %v527 = vsel %vm525, %v524, 0
    %v530 = vsel %vm200, %v523, 0
    %532 = vmatpush.msra.mxu0 0.0
    %533 = vmatpush.msra.mxu0 0.0
    %534 = vmatpush.msra.mxu0 0.0
    %535 = vmatpush.msra.mxu0 0.0
    %536 = vmatpush.msra.mxu0 0.0
    %537 = vmatpush.msra.mxu0 0.0
    %538 = vmatpush.msra.mxu0 0.0
    %539 = vmatpush.msra.mxu0 0.0
    %540 = vmatpush.msra.mxu0 0.0
    %541 = vmatpush.msra.mxu0 0.0
    %542 = vmatpush.msra.mxu0 0.0
    %543 = vmatpush.msra.mxu0 0.0
    %544 = vmatpush.msra.mxu0 0.0
    %545 = vmatpush.msra.mxu0 %v530
    %546 = vmatpush.msra.mxu0 %v522
    %547 = vmatpush.msra.mxu0 %v521
    %548 = vmatmul.f32.gmra.mxu0 %v527
    %v549 = vpop.f32.mrf.mxu0
    %v550 = vadd.f32 0.0, %v549
    %551 = vdwg.mxu0
    %v552 = vld [vmem:[%s5] sm:$0xff]
    %s553 = scalar_lea.vmem %s4, 4
    %v554 = vld [vmem:[%s553] sm:$0xf]
    %v556 = vsel %vm525, %v554, 0
    %558 = vmatpush.msra.mxu0 0.0
    %559 = vmatpush.msra.mxu0 0.0
    %560 = vmatpush.msra.mxu0 0.0
    %561 = vmatpush.msra.mxu0 0.0
    %562 = vmatpush.msra.mxu0 0.0
    %563 = vmatpush.msra.mxu0 0.0
    %564 = vmatpush.msra.mxu0 0.0
    %565 = vmatpush.msra.mxu0 0.0
    %566 = vmatpush.msra.mxu0 0.0
    %567 = vmatpush.msra.mxu0 0.0
    %568 = vmatpush.msra.mxu0 0.0
    %569 = vmatpush.msra.mxu0 0.0
    %570 = vmatpush.msra.mxu0 0.0
    %571 = vmatpush.msra.mxu0 %v530
    %572 = vmatpush.msra.mxu0 %v522
    %573 = vmatpush.msra.mxu0 %v521
    %574 = vmatmul.f32.gmra.mxu0 %v556
    %v575 = vpop.f32.mrf.mxu0
    %v576 = vadd.f32 0.0, %v575
    %577 = vdwg.mxu0
    %s578 = scalar_lea.vmem %s5, 8
    %v579 = vld [vmem:[%s578] sm:$0xff]
    %vm580 = vcmask 64512
    %v582 = vsel %vm580, %v576, 0
    %584 = vmatpush.msra.mxu0 0.0
    %585 = vmatpush.msra.mxu0 0.0
    %586 = vmatpush.msra.mxu0 0.0
    %587 = vmatpush.msra.mxu0 0.0
    %588 = vmatpush.msra.mxu0 0.0
    %589 = vmatpush.msra.mxu0 0.0
    %590 = vmatpush.msra.mxu0 0.0
    %591 = vmatpush.msra.mxu0 0.0
    %592 = vmatpush.msra.mxu0 0.0
    %593 = vmatpush.msra.mxu0 0.0
    %594 = vmatpush.msra.mxu0 0.0
    %595 = vmatpush.msra.mxu0 0.0
    %596 = vmatpush.msra.mxu0 0.0
    %597 = vmatpush.msra.mxu0 0.0
    %598 = vmatpush.msra.mxu0 0.0
    %599 = vmatpush.msra.mxu0 %v579
    %600 = vmatmul.f32.gmra.mxu0 %v582
    %v601 = vpop.f32.mrf.mxu0
    %v602 = vadd.f32 0.0, %v601
    %603 = vdwg.mxu0
    %v605 = vsel %vm580, %v550, 0
    %607 = vmatpush.msra.mxu0 0.0
    %608 = vmatpush.msra.mxu0 0.0
    %609 = vmatpush.msra.mxu0 0.0
    %610 = vmatpush.msra.mxu0 0.0
    %611 = vmatpush.msra.mxu0 0.0
    %612 = vmatpush.msra.mxu0 0.0
    %613 = vmatpush.msra.mxu0 0.0
    %614 = vmatpush.msra.mxu0 0.0
    %615 = vmatpush.msra.mxu0 0.0
    %616 = vmatpush.msra.mxu0 0.0
    %617 = vmatpush.msra.mxu0 0.0
    %618 = vmatpush.msra.mxu0 0.0
    %619 = vmatpush.msra.mxu0 0.0
    %620 = vmatpush.msra.mxu0 0.0
    %621 = vmatpush.msra.mxu0 0.0
    %622 = vmatpush.msra.mxu0 %v552
    %623 = vmatmul.f32.gmra.mxu0 %v605
    %v624 = vpop.f32.mrf.mxu0
    %v625 = vadd.f32 %v602, %v624
    %626 = vdwg.mxu0
    %s627 = scalar_lea.vmem %s4, 8
    %v628 = vld [vmem:[%s627] sm:$0xf]
    %v630 = vsel %vm525, %v628, 0
    %632 = vmatpush.msra.mxu0 0.0
    %633 = vmatpush.msra.mxu0 0.0
    %634 = vmatpush.msra.mxu0 0.0
    %635 = vmatpush.msra.mxu0 0.0
    %636 = vmatpush.msra.mxu0 0.0
    %637 = vmatpush.msra.mxu0 0.0
    %638 = vmatpush.msra.mxu0 0.0
    %639 = vmatpush.msra.mxu0 0.0
    %640 = vmatpush.msra.mxu0 0.0
    %641 = vmatpush.msra.mxu0 0.0
    %642 = vmatpush.msra.mxu0 0.0
    %643 = vmatpush.msra.mxu0 0.0
    %644 = vmatpush.msra.mxu0 0.0
    %645 = vmatpush.msra.mxu0 %v530
    %646 = vmatpush.msra.mxu0 %v522
    %647 = vmatpush.msra.mxu0 %v521
    %648 = vmatmul.f32.gmra.mxu0 %v630
    %v649 = vpop.f32.mrf.mxu0
    %v650 = vadd.f32 0.0, %v649
    %651 = vdwg.mxu0
    %s652 = scalar_lea.vmem %s5, 16
    %v653 = vld [vmem:[%s652] sm:$0xff]
    %v655 = vsel %vm580, %v650, 0
    %657 = vmatpush.msra.mxu0 0.0
    %658 = vmatpush.msra.mxu0 0.0
    %659 = vmatpush.msra.mxu0 0.0
    %660 = vmatpush.msra.mxu0 0.0
    %661 = vmatpush.msra.mxu0 0.0
    %662 = vmatpush.msra.mxu0 0.0
    %663 = vmatpush.msra.mxu0 0.0
    %664 = vmatpush.msra.mxu0 0.0
    %665 = vmatpush.msra.mxu0 0.0
    %666 = vmatpush.msra.mxu0 0.0
    %667 = vmatpush.msra.mxu0 0.0
    %668 = vmatpush.msra.mxu0 0.0
    %669 = vmatpush.msra.mxu0 0.0
    %670 = vmatpush.msra.mxu0 0.0
    %671 = vmatpush.msra.mxu0 0.0
    %672 = vmatpush.msra.mxu0 %v653
    %673 = vmatmul.f32.gmra.mxu0 %v655
    %v674 = vpop.f32.mrf.mxu0
    %v675 = vadd.f32 0.0, %v674
    %676 = vdwg.mxu0
    %v677 = vadd.f32 %v625, %v675
    %s678 = scalar_lea.vmem %s4, 12
    %v679 = vld [vmem:[%s678] sm:$0xf]
    %v681 = vsel %vm525, %v679, 0
    %683 = vmatpush.msra.mxu0 0.0
    %684 = vmatpush.msra.mxu0 0.0
    %685 = vmatpush.msra.mxu0 0.0
    %686 = vmatpush.msra.mxu0 0.0
    %687 = vmatpush.msra.mxu0 0.0
    %688 = vmatpush.msra.mxu0 0.0
    %689 = vmatpush.msra.mxu0 0.0
    %690 = vmatpush.msra.mxu0 0.0
    %691 = vmatpush.msra.mxu0 0.0
    %692 = vmatpush.msra.mxu0 0.0
    %693 = vmatpush.msra.mxu0 0.0
    %694 = vmatpush.msra.mxu0 0.0
    %695 = vmatpush.msra.mxu0 0.0
    %696 = vmatpush.msra.mxu0 %v530
    %697 = vmatpush.msra.mxu0 %v522
    %698 = vmatpush.msra.mxu0 %v521
    %699 = vmatmul.f32.gmra.mxu0 %v681
    %v700 = vpop.f32.mrf.mxu0
    %v701 = vadd.f32 0.0, %v700
    %702 = vdwg.mxu0
    %s703 = scalar_lea.vmem %s5, 24
    %v704 = vld [vmem:[%s703] sm:$0xff]
    %v706 = vsel %vm580, %v701, 0
    %708 = vmatpush.msra.mxu0 0.0
    %709 = vmatpush.msra.mxu0 0.0
    %710 = vmatpush.msra.mxu0 0.0
    %711 = vmatpush.msra.mxu0 0.0
    %712 = vmatpush.msra.mxu0 0.0
    %713 = vmatpush.msra.mxu0 0.0
    %714 = vmatpush.msra.mxu0 0.0
    %715 = vmatpush.msra.mxu0 0.0
    %716 = vmatpush.msra.mxu0 0.0
    %717 = vmatpush.msra.mxu0 0.0
    %718 = vmatpush.msra.mxu0 0.0
    %719 = vmatpush.msra.mxu0 0.0
    %720 = vmatpush.msra.mxu0 0.0
    %721 = vmatpush.msra.mxu0 0.0
    %722 = vmatpush.msra.mxu0 0.0
    %723 = vmatpush.msra.mxu0 %v704
    %724 = vmatmul.f32.gmra.mxu0 %v706
    %v725 = vpop.f32.mrf.mxu0
    %v726 = vadd.f32 0.0, %v725
    %727 = vdwg.mxu0
    %v728 = vadd.f32 %v677, %v726
    %s729 = scalar_lea.vmem %s4, 16
    %v730 = vld [vmem:[%s729] sm:$0xf]
    %v732 = vsel %vm525, %v730, 0
    %734 = vmatpush.msra.mxu0 0.0
    %735 = vmatpush.msra.mxu0 0.0
    %736 = vmatpush.msra.mxu0 0.0
    %737 = vmatpush.msra.mxu0 0.0
    %738 = vmatpush.msra.mxu0 0.0
    %739 = vmatpush.msra.mxu0 0.0
    %740 = vmatpush.msra.mxu0 0.0
    %741 = vmatpush.msra.mxu0 0.0
    %742 = vmatpush.msra.mxu0 0.0
    %743 = vmatpush.msra.mxu0 0.0
    %744 = vmatpush.msra.mxu0 0.0
    %745 = vmatpush.msra.mxu0 0.0
    %746 = vmatpush.msra.mxu0 0.0
    %747 = vmatpush.msra.mxu0 %v530
    %748 = vmatpush.msra.mxu0 %v522
    %749 = vmatpush.msra.mxu0 %v521
    %750 = vmatmul.f32.gmra.mxu0 %v732
    %v751 = vpop.f32.mrf.mxu0
    %v752 = vadd.f32 0.0, %v751
    %753 = vdwg.mxu0
    %s754 = scalar_lea.vmem %s5, 32
    %v755 = vld [vmem:[%s754] sm:$0xff]
    %v757 = vsel %vm580, %v752, 0
    %759 = vmatpush.msra.mxu0 0.0
    %760 = vmatpush.msra.mxu0 0.0
    %761 = vmatpush.msra.mxu0 0.0
    %762 = vmatpush.msra.mxu0 0.0
    %763 = vmatpush.msra.mxu0 0.0
    %764 = vmatpush.msra.mxu0 0.0
    %765 = vmatpush.msra.mxu0 0.0
    %766 = vmatpush.msra.mxu0 0.0
    %767 = vmatpush.msra.mxu0 0.0
    %768 = vmatpush.msra.mxu0 0.0
    %769 = vmatpush.msra.mxu0 0.0
    %770 = vmatpush.msra.mxu0 0.0
    %771 = vmatpush.msra.mxu0 0.0
    %772 = vmatpush.msra.mxu0 0.0
    %773 = vmatpush.msra.mxu0 0.0
    %774 = vmatpush.msra.mxu0 %v755
    %775 = vmatmul.f32.gmra.mxu0 %v757
    %v776 = vpop.f32.mrf.mxu0
    %v777 = vadd.f32 0.0, %v776
    %778 = vdwg.mxu0
    %v779 = vadd.f32 %v728, %v777
    %v780 = vld [vmem:[%s6] sm:$0x1]
    %v782 = vperm.slane %v780, 0
    %v784 = vadd.f32 %v779, %v782
    %v785 = vmax.f32 %v784, 0.0
    %v786 = vld [vmem:[%s7] sm:$0x3]
    %v788 = vsel %vm190, %v786, 0
    %v791 = vsel %vm200, %v785, 0
    %793 = vmatpush.msra.mxu0 0.0
    %794 = vmatpush.msra.mxu0 0.0
    %795 = vmatpush.msra.mxu0 0.0
    %796 = vmatpush.msra.mxu0 0.0
    %797 = vmatpush.msra.mxu0 0.0
    %798 = vmatpush.msra.mxu0 0.0
    %799 = vmatpush.msra.mxu0 0.0
    %800 = vmatpush.msra.mxu0 0.0
    %801 = vmatpush.msra.mxu0 0.0
    %802 = vmatpush.msra.mxu0 0.0
    %803 = vmatpush.msra.mxu0 0.0
    %804 = vmatpush.msra.mxu0 0.0
    %805 = vmatpush.msra.mxu0 0.0
    %806 = vmatpush.msra.mxu0 0.0
    %807 = vmatpush.msra.mxu0 0.0
    %808 = vmatpush.msra.mxu0 %v791
    %809 = vmatmul.f32.gmra.mxu0 %v788
    %v810 = vpop.f32.mrf.mxu0
    %v811 = vadd.f32 0.0, %v810
    %812 = vdwg.mxu0
    %v813 = vld [vmem:[%s8] sm:$0xff]
    %v814 = vld [vmem:[%s8 + $0x8] sm:$0xff]
    %s815 = scalar_lea.vmem %s7, 2
    %v816 = vld [vmem:[%s815] sm:$0x3]
    %v818 = vsel %vm190, %v816, 0
    %820 = vmatpush.msra.mxu0 0.0
    %821 = vmatpush.msra.mxu0 0.0
    %822 = vmatpush.msra.mxu0 0.0
    %823 = vmatpush.msra.mxu0 0.0
    %824 = vmatpush.msra.mxu0 0.0
    %825 = vmatpush.msra.mxu0 0.0
    %826 = vmatpush.msra.mxu0 0.0
    %827 = vmatpush.msra.mxu0 0.0
    %828 = vmatpush.msra.mxu0 0.0
    %829 = vmatpush.msra.mxu0 0.0
    %830 = vmatpush.msra.mxu0 0.0
    %831 = vmatpush.msra.mxu0 0.0
    %832 = vmatpush.msra.mxu0 0.0
    %833 = vmatpush.msra.mxu0 0.0
    %834 = vmatpush.msra.mxu0 0.0
    %835 = vmatpush.msra.mxu0 %v791
    %836 = vmatmul.f32.gmra.mxu0 %v818
    %v837 = vpop.f32.mrf.mxu0
    %v838 = vadd.f32 0.0, %v837
    %839 = vdwg.mxu0
    %s840 = scalar_lea.vmem %s8, 16
    %v841 = vld [vmem:[%s840] sm:$0xff]
    %v842 = vld [vmem:[%s840 + $0x8] sm:$0xff]
    %vm843 = vcmask 130048
    %v845 = vsel %vm843, %v838, 0
    %847 = vmatpush.msra.mxu0 0.0
    %848 = vmatpush.msra.mxu0 0.0
    %849 = vmatpush.msra.mxu0 0.0
    %850 = vmatpush.msra.mxu0 0.0
    %851 = vmatpush.msra.mxu0 0.0
    %852 = vmatpush.msra.mxu0 0.0
    %853 = vmatpush.msra.mxu0 0.0
    %854 = vmatpush.msra.mxu0 0.0
    %855 = vmatpush.msra.mxu0 0.0
    %856 = vmatpush.msra.mxu0 0.0
    %857 = vmatpush.msra.mxu0 0.0
    %858 = vmatpush.msra.mxu0 0.0
    %859 = vmatpush.msra.mxu0 0.0
    %860 = vmatpush.msra.mxu0 0.0
    %861 = vmatpush.msra.mxu0 %v842
    %862 = vmatpush.msra.mxu0 %v841
    %863 = vmatmul.f32.gmra.mxu0 %v845
    %v864 = vpop.f32.mrf.mxu0
    %v865 = vadd.f32 0.0, %v864
    %866 = vdwg.mxu0
    %v868 = vsel %vm843, %v811, 0
    %870 = vmatpush.msra.mxu0 0.0
    %871 = vmatpush.msra.mxu0 0.0
    %872 = vmatpush.msra.mxu0 0.0
    %873 = vmatpush.msra.mxu0 0.0
    %874 = vmatpush.msra.mxu0 0.0
    %875 = vmatpush.msra.mxu0 0.0
    %876 = vmatpush.msra.mxu0 0.0
    %877 = vmatpush.msra.mxu0 0.0
    %878 = vmatpush.msra.mxu0 0.0
    %879 = vmatpush.msra.mxu0 0.0
    %880 = vmatpush.msra.mxu0 0.0
    %881 = vmatpush.msra.mxu0 0.0
    %882 = vmatpush.msra.mxu0 0.0
    %883 = vmatpush.msra.mxu0 0.0
    %884 = vmatpush.msra.mxu0 %v814
    %885 = vmatpush.msra.mxu0 %v813
    %886 = vmatmul.f32.gmra.mxu0 %v868
    %v887 = vpop.f32.mrf.mxu0
    %v888 = vadd.f32 %v865, %v887
    %889 = vdwg.mxu0
    %v890 = vld [vmem:[#allocation7] sm:$0x1]
    %v892 = vperm.slane %v890, 0
    %v894 = vadd.f32 %v888, %v892
    %v895 = vtanh.pop %v894
    %v896 = vld [vmem:[%s10] sm:$0xff]
    %v897 = vld [vmem:[%s10 + $0x8] sm:$0xff]
    %v898 = vld [vmem:[#allocation8] sm:$0x1]
    %v900 = vperm.slane %v898, 0
    %v903 = vsel %vm843, %v895, 0
    %905 = vmatpush.msra.mxu0 0.0
    %906 = vmatpush.msra.mxu0 0.0
    %907 = vmatpush.msra.mxu0 0.0
    %908 = vmatpush.msra.mxu0 0.0
    %909 = vmatpush.msra.mxu0 0.0
    %910 = vmatpush.msra.mxu0 0.0
    %911 = vmatpush.msra.mxu0 0.0
    %912 = vmatpush.msra.mxu0 0.0
    %913 = vmatpush.msra.mxu0 0.0
    %914 = vmatpush.msra.mxu0 0.0
    %915 = vmatpush.msra.mxu0 0.0
    %916 = vmatpush.msra.mxu0 0.0
    %917 = vmatpush.msra.mxu0 0.0
    %918 = vmatpush.msra.mxu0 0.0
    %919 = vmatpush.msra.mxu0 %v897
    %920 = vmatpush.msra.mxu0 %v896
    %921 = vmatmul.f32.gmra.mxu0 %v903
    %v922 = vpop.f32.mrf.mxu0
    %v923 = vadd.f32 %v900, %v922
    %924 = vdwg.mxu0
    %vm925 = vcmask 58368
    %926 = vst.msk [vmem:[#allocation10] sm:$0x3] %vm925, %v923
    // Predicated region
    $region66: #{encoder_cnnet1d_forward.1} parent=1 // pred_check
      _
    $region67: #{encoder_cnnet1d_forward.1} parent=1 // pred_check_branch
      %928 = sbr.rel (0) target = $region69
    $region68: #{encoder_cnnet1d_forward.1} parent=1 // pred_region
      %930 = vsyncadd [#allocation4], 0
      %s932 = sshll.u32 [#allocation10], 4
      %s933 = int_to_ptr.vmem [resolvable:$true] %s932
      %s934 = sshll.u32 %s12, 4
      %s935 = int_to_ptr.hbm [resolvable:$true] %s934
      %937 = dma.vmem_to_hbm [thread:$0]  %s933, 32, %s935, [#allocation4]
    $region69: #{encoder_cnnet1d_forward.1} parent=1 // pred_fallthru
      _
    // Predicated region
    $region70: #{encoder_cnnet1d_forward.1} parent=1 // pred_check
      _
    $region71: #{encoder_cnnet1d_forward.1} parent=1 // pred_check_branch
      %939 = sbr.rel (0) target = $region73
    $region72: #{encoder_cnnet1d_forward.1} parent=1 // pred_region
      %941 = dma.done [#allocation4], 32
    $region73: #{encoder_cnnet1d_forward.1} parent=1 // pred_fallthru
      _
    %942 = vsyncpa [#allocation3], 1
    %943 = vsyncpa [#allocation6], 1
    %944 = vsyncpa [#allocation9], 1
    %945 = vsyncpa [#allocation4], 1

</llo_original>
